<compile_context>
chip_gen: v5e
topology: v5e:2x2
jax: 0.10.0
libtpu: 0.0.40
codegen_flags: <defaults>
</compile_context>

<pallas_src>
import jax
import jax.numpy as jnp
from jax.experimental import pallas as pl
from jax.experimental.pallas import tpu as pltpu


def mlp_kernel(x_ref, w1_ref, b1_ref, w2_ref, b2_ref, o_ref):
    # Layer 1 on the MXU: (TB, D) @ (D, 128) + (1, 128), f32 accumulation
    # (works for f32 or bf16 x/w1; accumulation stays f32).
    h = jnp.dot(x_ref[...], w1_ref[...], preferred_element_type=jnp.float32)
    h = h + b1_ref[...]
    # LeakyReLU, negative_slope = 0.01 (PyTorch default).
    h = jnp.where(h > 0, h, 0.01 * h)
    # Layer 2 (128 -> 1) on the VPU/XLU: elementwise multiply + lane reduce.
    y = jnp.sum(h * w2_ref[...], axis=-1) + b2_ref[0, 0]      # (TB,)
    # Lane-dense store: batch rows map onto lanes of the (1, 1, TB) out tile.
    o_ref[...] = y[None, None, :].astype(o_ref.dtype)


def _round_up(n, m):
    return ((n + m - 1) // m) * m


def _tpu_vmem_capacity_bytes():
    """Physical VMEM of the current chip; conservative (v7x) fallback."""
    try:
        info = pltpu.get_tpu_info()
        cap = getattr(info, "vmem_capacity_bytes", None)
        if cap:
            return int(cap)
    except Exception:
        pass
    return 64 * 1024 * 1024   # v7x has the smallest physical VMEM today


def _choose_tile_rows(batch, feat, x_itemsize, vmem_budget_bytes, cap=32768):
    """Pick the row-tile size TB (multiple of 128).

    Accounts for VMEM lane padding: a (TB, D) x block really occupies
    TB * max(roundup(D,128),128) * itemsize bytes per buffer, and the
    (1, 1, TB) output slab pads its single sublane to 8.  Both are
    double-buffered by the pipeline.  Weights are tiny and covered by the
    headroom the caller leaves in `vmem_budget_bytes`.
    """
    need = _round_up(max(batch, 1), 128)
    dp = _round_up(max(feat, 1), 128)                       # lane-padded feature width
    bytes_per_row = 2 * dp * x_itemsize + 2 * 8 * 4         # x (2 bufs) + out (2 bufs)
    tb = min(_round_up(cap, 128), need)
    while tb > 128 and tb * bytes_per_row > vmem_budget_bytes:
        tb = _round_up(tb // 2, 128)
    # Prefer >= 2 grid steps when the batch allows it: lets the DMA/compute
    # pipeline overlap at all and keeps both v7x TensorCores busy via the
    # "parallel" batch axis.  Harmless on v5e/v6e.
    if need > 128:
        tb = min(tb, max(128, _round_up(-(-batch // 2), 128)))
    return tb


def my_model_forward(x, w1, b1, w2, b2, *, tile_rows=None, vmem_limit_bytes=None):
    """x: (B, D) -> (B,) f32, matching My_Model.forward.

    Parameter layout: w1 is (D, 128) (nn.Linear weight transposed), b1 is
    (1, 128), w2 is (1, 128) (native layer-2 weight), b2 is (1, 1).
    x may be float32 or bfloat16; bf16 halves the dominant HBM stream while
    the matmul still accumulates in f32.
    """
    B, D = x.shape
    H = w1.shape[1]

    # Match the tiny resident layer-1 weight to the x stream dtype (cheap);
    # b1/w2/b2 stay f32 for the f32 epilogue.
    if w1.dtype != x.dtype:
        w1 = w1.astype(x.dtype)

    if vmem_limit_bytes is None:
        # 32 MiB on v7x (64 MiB physical), 64 MiB on v5e/v6e (128 MiB physical).
        vmem_limit_bytes = min(_tpu_vmem_capacity_bytes() // 2, 64 * 1024 * 1024)
    tile_budget = max(vmem_limit_bytes - 4 * 1024 * 1024, 1 * 1024 * 1024)

    if tile_rows is None:
        TB = _choose_tile_rows(B, D, jnp.dtype(x.dtype).itemsize, tile_budget)
    else:
        TB = max(128, _round_up(tile_rows, 128))
    G = pl.cdiv(B, TB)

    # NOTE: no jnp.pad(x, ...) — the ragged last tile is read as a Pallas
    # boundary block; its out-of-range rows produce garbage outputs that are
    # sliced off below.  This avoids an extra full HBM read+write of x.
    out = pl.pallas_call(
        mlp_kernel,
        out_shape=jax.ShapeDtypeStruct((G, 1, TB), jnp.float32),
        grid=(G,),
        in_specs=[
            # x: streamed (TB, D) row tiles, double-buffered by the pipeline.
            pl.BlockSpec((TB, D), lambda i: (i, 0)),
            # Weights/biases: same block every step -> stay VMEM-resident.
            pl.BlockSpec((D, H), lambda i: (0, 0)),
            pl.BlockSpec((1, H), lambda i: (0, 0)),
            pl.BlockSpec((1, H), lambda i: (0, 0)),
            # b2 scalar in SMEM (avoids a padded (1,1) VMEM tile + DMA).
            pl.BlockSpec(memory_space=pltpu.SMEM),
        ],
        # Lane-dense output slab per grid step.
        out_specs=pl.BlockSpec((1, 1, TB), lambda i: (i, 0, 0)),
        compiler_params=pltpu.CompilerParams(
            # Batch tiles are independent -> shardable across v7x's 2 TCs.
            dimension_semantics=("parallel",),
            vmem_limit_bytes=int(vmem_limit_bytes),
        ),
    )(x, w1, b1, w2, b2)

    # (G, 1, TB) -> (G*TB,) -> drop ragged-tile garbage rows.  This is the
    # squeeze(1) plus layout glue.
    return out.reshape(-1)[:B]


def init_params(key, input_dim, hidden=128):
    """Deterministic init mimicking nn.Linear's U(-1/sqrt(fan_in), +1/sqrt(fan_in))."""
    k1, k2, k3, k4 = jax.random.split(key, 4)
    bound1 = 1.0 / jnp.sqrt(jnp.float32(input_dim))
    bound2 = 1.0 / jnp.sqrt(jnp.float32(hidden))
    w1 = jax.random.uniform(k1, (input_dim, hidden), jnp.float32, -bound1, bound1)
    b1 = jax.random.uniform(k2, (1, hidden), jnp.float32, -bound1, bound1)
    w2 = jax.random.uniform(k3, (1, hidden), jnp.float32, -bound2, bound2)
    b2 = jax.random.uniform(k4, (1, 1), jnp.float32, -bound2, bound2)
    return w1, b1, w2, b2


if __name__ == "__main__":
    key = jax.random.PRNGKey(0)
    kx, kp, kx2 = jax.random.split(key, 3)

    input_dim = 32
    w1, b1, w2, b2 = init_params(kp, input_dim)

    def reference(x):
        h = jnp.dot(x, w1, precision=jax.lax.Precision.HIGHEST) + b1
        h = jnp.where(h > 0, h, 0.01 * h)
        y = jnp.dot(h, w2.T, precision=jax.lax.Precision.HIGHEST) + b2[0, 0]
        return y[:, 0]

    # Small case (toy HW1 sizes): single 128-row boundary tile, 120 garbage
    # rows sliced off (exercises the no-pad ragged path).
    x_small = jax.random.normal(kx, (8, input_dim), jnp.float32)
    y_small = jax.block_until_ready(my_model_forward(x_small, w1, b1, w2, b2))
    assert y_small.shape == (8,)
    assert jnp.allclose(y_small, reference(x_small), atol=1e-4, rtol=1e-4)

    # Auto-tiled ragged batch: B=600 -> TB=384, G=2 (>=2 steps for v7x), ragged
    # last tile with 216 real rows, no wrapper-side padding copy of x.
    x_big = jax.random.normal(kx2, (600, input_dim), jnp.float32)
    y_big = jax.block_until_ready(my_model_forward(x_big, w1, b1, w2, b2))
    assert y_big.shape == (600,)
    assert jnp.allclose(y_big, reference(x_big), atol=1e-4, rtol=1e-4)

    # Explicit small tile: 3 grid steps, ragged last tile of 88 real rows.
    y_big3 = jax.block_until_ready(
        my_model_forward(x_big, w1, b1, w2, b2, tile_rows=256))
    assert jnp.allclose(y_big3, reference(x_big), atol=1e-4, rtol=1e-4)

    # bf16 x stream (halves the dominant HBM read); matmul still accumulates in
    # f32, so tolerance only needs to absorb the bf16 products.
    x_bf16 = x_big.astype(jnp.bfloat16)
    y_bf16 = jax.block_until_ready(my_model_forward(x_bf16, w1, b1, w2, b2))
    assert y_bf16.shape == (600,)
    assert jnp.allclose(y_bf16, reference(x_bf16.astype(jnp.float32)),
                        atol=2e-2, rtol=2e-2)

    print("KERNEL_OK")
</pallas_src>

<mosaic_0001>
module attributes {stable_mosaic.version = 11 : i64} {
  func.func @mlp_kernel(%arg0: i32, %arg1: memref<128x32xf32, #tpu.memory_space<vmem>>, %arg2: memref<32x128xf32, #tpu.memory_space<vmem>>, %arg3: memref<1x128xf32, #tpu.memory_space<vmem>>, %arg4: memref<1x128xf32, #tpu.memory_space<vmem>>, %arg5: memref<1x1xf32, #tpu.memory_space<smem>>, %arg6: memref<1x1x128xf32, #tpu.memory_space<vmem>>) attributes {dimension_semantics = [#tpu.dimension_semantics<parallel>], iteration_bounds = array<i64: 1>, scalar_prefetch = 0 : i64, scratch_operands = 0 : i64, tpu.core_type = #tpu.core_type<tc>, window_params = [{transform_indices = @transform_0, window_bounds = array<i64: 128, 32>}, {pipeline_mode = #tpu.pipeline_mode<synchronous>, transform_indices = @transform_1, window_bounds = array<i64: 32, 128>}, {pipeline_mode = #tpu.pipeline_mode<synchronous>, transform_indices = @transform_2, window_bounds = array<i64: 1, 128>}, {pipeline_mode = #tpu.pipeline_mode<synchronous>, transform_indices = @transform_3, window_bounds = array<i64: 1, 128>}, {transform_indices = @transform_4, window_bounds = array<i64: 1, 1>}, {transform_indices = @transform_5, window_bounds = array<i64: 1, 1, 128>}]} {
    %c0 = arith.constant 0 : index
    %c0_0 = arith.constant 0 : index
    %0 = vector.load %arg1[%c0, %c0_0] : memref<128x32xf32, #tpu.memory_space<vmem>>, vector<128x32xf32>
    %c0_1 = arith.constant 0 : index
    %c0_2 = arith.constant 0 : index
    %1 = vector.load %arg2[%c0_1, %c0_2] : memref<32x128xf32, #tpu.memory_space<vmem>>, vector<32x128xf32>
    %cst = arith.constant dense<0.000000e+00> : vector<128x128xf32>
    %2 = tpu.matmul %0, %1, %cst {dimension_numbers = #tpu.dot_dimension_numbers<[1], [0], [0], [1], [0, 0, 1, 1], [], []>} : vector<128x32xf32>, vector<32x128xf32>, vector<128x128xf32> -> vector<128x128xf32>
    %c0_3 = arith.constant 0 : index
    %c0_4 = arith.constant 0 : index
    %3 = vector.load %arg3[%c0_3, %c0_4] : memref<1x128xf32, #tpu.memory_space<vmem>>, vector<1x128xf32>
    %4 = vector.broadcast %3 : vector<1x128xf32> to vector<128x128xf32>
    %5 = arith.addf %2, %4 : vector<128x128xf32>
    %cst_5 = arith.constant 0.000000e+00 : f32
    %6 = vector.broadcast %cst_5 : f32 to vector<128x128xf32>
    %7 = arith.cmpf ogt, %5, %6 : vector<128x128xf32>
    %cst_6 = arith.constant 0.00999999977 : f32
    %8 = vector.broadcast %cst_6 : f32 to vector<128x128xf32>
    %9 = arith.mulf %8, %5 : vector<128x128xf32>
    %10 = arith.select %7, %5, %9 : vector<128x128xi1>, vector<128x128xf32>
    %c0_7 = arith.constant 0 : index
    %c0_8 = arith.constant 0 : index
    %11 = vector.load %arg4[%c0_7, %c0_8] : memref<1x128xf32, #tpu.memory_space<vmem>>, vector<1x128xf32>
    %12 = vector.broadcast %11 : vector<1x128xf32> to vector<128x128xf32>
    %13 = arith.mulf %10, %12 : vector<128x128xf32>
    %cst_9 = arith.constant dense<0.000000e+00> : vector<128xf32>
    %14 = vector.multi_reduction <add>, %13, %cst_9 [1] : vector<128x128xf32> to vector<128xf32>
    %c0_10 = arith.constant 0 : index
    %c0_11 = arith.constant 0 : index
    %15 = memref.load %arg5[%c0_10, %c0_11] : memref<1x1xf32, #tpu.memory_space<smem>>
    %16 = vector.broadcast %15 : f32 to vector<128xf32>
    %17 = arith.addf %14, %16 : vector<128xf32>
    %18 = vector.shape_cast %17 : vector<128xf32> to vector<1x1x128xf32>
    %c0_12 = arith.constant 0 : index
    %c0_13 = arith.constant 0 : index
    %c0_14 = arith.constant 0 : index
    %19 = vector.load %arg6[%c0_12, %c0_13, %c0_14] : memref<1x1x128xf32, #tpu.memory_space<vmem>>, vector<1x1x128xf32>
    tpu.vector_store %arg6[%c0_12, %c0_13, %c0_14], %18 {strides = array<i32>} : memref<1x1x128xf32, #tpu.memory_space<vmem>>, vector<1x1x128xf32>,
    return
  }
  func.func @transform_0(%arg0: i32) -> (i32, i32) {
    %c0_i32 = arith.constant 0 : i32
    %c0_i32_0 = arith.constant 0 : i32
    return %arg0, %c0_i32 : i32, i32
  }
  func.func @transform_1(%arg0: i32) -> (i32, i32) {
    %c0_i32 = arith.constant 0 : i32
    %c0_i32_0 = arith.constant 0 : i32
    %c0_i32_1 = arith.constant 0 : i32
    return %c0_i32, %c0_i32_0 : i32, i32
  }
  func.func @transform_2(%arg0: i32) -> (i32, i32) {
    %c0_i32 = arith.constant 0 : i32
    %c0_i32_0 = arith.constant 0 : i32
    %c0_i32_1 = arith.constant 0 : i32
    return %c0_i32, %c0_i32_0 : i32, i32
  }
  func.func @transform_3(%arg0: i32) -> (i32, i32) {
    %c0_i32 = arith.constant 0 : i32
    %c0_i32_0 = arith.constant 0 : i32
    %c0_i32_1 = arith.constant 0 : i32
    return %c0_i32, %c0_i32_0 : i32, i32
  }
  func.func @transform_4(%arg0: i32) -> (i32, i32) {
    %c0_i32 = arith.constant 0 : i32
    %c0_i32_0 = arith.constant 0 : i32
    %c0_i32_1 = arith.constant 0 : i32
    return %c0_i32, %c0_i32_0 : i32, i32
  }
  func.func @transform_5(%arg0: i32) -> (i32, i32, i32) {
    %c0_i32 = arith.constant 0 : i32
    %c0_i32_0 = arith.constant 0 : i32
    %c0_i32_1 = arith.constant 0 : i32
    return %arg0, %c0_i32, %c0_i32_0 : i32, i32, i32
  }
}

</mosaic_0001>

<llo_original>
// kernel: tpu_custom_call.1
$region0: #{tpu_custom_call.1}
  #allocation0 [shape = 'u32[]', space=smem, size = 0x4, offset = 0x4, fixed_abs, tag = 'smem constant byte address 0x4 - core index']
  #allocation1 [shape = 'u32[72,128]{1,0:T(1,128)}', space=vmem, size = 0x9000, scoped, tag = 'internal scratch']
  #allocation2 [shape = 'f32[1,1]{1,0:T(1,128)S(6)}', space=smem, size = 0x200, scoped, tag = 'scoped memory for tpu_custom_call.1']
  %s0 = inlined_call_operand.hbm [shape: f32[8,32], index: 0, kind: input, shape index: {}]
  %s1 = inlined_call_operand.hbm [shape: f32[32,128], index: 1, kind: input, shape index: {}]
  %s2 = inlined_call_operand.vmem [shape: f32[1,128], index: 2, kind: input, shape index: {}]
  %s3 = inlined_call_operand.vmem [shape: f32[1,128], index: 3, kind: input, shape index: {}]
  %s4 = inlined_call_operand.<no memory space> [shape: f32[1,1], index: 4, kind: input, shape index: {}]
  %s5 = inlined_call_operand.hbm [shape: f32[1,1,128], index: 5, kind: output, shape index: {}]
  %s6 = sld [smem:[#allocation0]]
  $region38: #{tpu_custom_call.1} parent=0
    _
  %s8 = ssub.s32 1, %s6
  %s9 = scalar_select 0, %s8, %s6
  %10 = sst [smem:[#allocation2]] %s4
  $region1: #{tpu_custom_call.1} parent=0
    #allocation3 [shape = 'u8[65536]{0}', space=vmem, size = 0x10000, scoped, tag = 'input window, operand 0, single buffered']
    #allocation4 [shape = 's32[1]{0}', space=sflag, size = 0x4, scoped, tag = 'scoped memory for tpu_custom_call.1']
    #allocation5 [shape = 's32[1]{0}', space=sflag, size = 0x4, scoped, tag = 'scoped memory for tpu_custom_call.1']
    #allocation6 [shape = 'u8[16384]{0}', space=vmem, size = 0x4000, scoped, tag = 'input window, operand 1, single buffered']
    #allocation7 [shape = 's32[1]{0}', space=sflag, size = 0x4, scoped, tag = 'scoped memory for tpu_custom_call.1']
    #allocation8 [shape = 'u8[512]{0}', space=vmem, size = 0x400, scoped, tag = 'output window, operand 0, single buffered']
    %11 = vsyncpa [#allocation4], 0
    %12 = vsyncpa [#allocation7], 0
    %13 = vsyncpa [#allocation5], 0
    // Predicated region
    $region2: #{tpu_custom_call.1} parent=1 // pred_check
      _
    $region3: #{tpu_custom_call.1} parent=1 // pred_check_branch
      %15 = sbr.rel (0) target = $region5
    $region4: #{tpu_custom_call.1} parent=1 // pred_region
      %17 = vsyncadd [#allocation4], 1920
      %s18 = sshll.u32 %s0, 4
      %s19 = int_to_ptr.hbm [resolvable:$true] %s18
      %s20 = sshll.u32 [#allocation3], 4
      %s21 = int_to_ptr.vmem [resolvable:$true] %s20
      %26 = dma.hbm_to_vmem [thread:$0]  %s19, 128, %s21, [#allocation4], 128, 128, 8
    $region5: #{tpu_custom_call.1} parent=1 // pred_fallthru
      _
    // Predicated region
    $region6: #{tpu_custom_call.1} parent=1 // pred_check
      _
    $region7: #{tpu_custom_call.1} parent=1 // pred_check_branch
      %28 = sbr.rel (0) target = $region9
    $region8: #{tpu_custom_call.1} parent=1 // pred_region
      %30 = vsyncadd [#allocation7], 0
      %s31 = sshll.u32 %s1, 4
      %s32 = int_to_ptr.hbm [resolvable:$true] %s31
      %s33 = sshll.u32 [#allocation6], 4
      %s34 = int_to_ptr.vmem [resolvable:$true] %s33
      %39 = dma.hbm_to_vmem [thread:$0]  %s32, 512, %s34, [#allocation7], 128, 128, 8
    $region9: #{tpu_custom_call.1} parent=1 // pred_fallthru
      _
    // Predicated region
    $region10: #{tpu_custom_call.1} parent=1 // pred_check
      _
    $region11: #{tpu_custom_call.1} parent=1 // pred_check_branch
      %41 = sbr.rel (0) target = $region13
    $region12: #{tpu_custom_call.1} parent=1 // pred_region
      _
    $region13: #{tpu_custom_call.1} parent=1 // pred_fallthru
      _
    // Predicated region
    $region14: #{tpu_custom_call.1} parent=1 // pred_check
      _
    $region15: #{tpu_custom_call.1} parent=1 // pred_check_branch
      %43 = sbr.rel (0) target = $region17
    $region16: #{tpu_custom_call.1} parent=1 // pred_region
      _
    $region17: #{tpu_custom_call.1} parent=1 // pred_fallthru
      _
    // Predicated region
    $region18: #{tpu_custom_call.1} parent=1 // pred_check
      _
    $region19: #{tpu_custom_call.1} parent=1 // pred_check_branch
      %45 = sbr.rel (0) target = $region21
    $region20: #{tpu_custom_call.1} parent=1 // pred_region
      _
    $region21: #{tpu_custom_call.1} parent=1 // pred_fallthru
      _
    // Predicated region
    $region22: #{tpu_custom_call.1} parent=1 // pred_check
      _
    $region23: #{tpu_custom_call.1} parent=1 // pred_check_branch
      %47 = sbr.rel (0) target = $region25
    $region24: #{tpu_custom_call.1} parent=1 // pred_region
      %49 = dma.done [#allocation4], 2048
    $region25: #{tpu_custom_call.1} parent=1 // pred_fallthru
      _
    // Predicated region
    $region26: #{tpu_custom_call.1} parent=1 // pred_check
      _
    $region27: #{tpu_custom_call.1} parent=1 // pred_check_branch
      %51 = sbr.rel (0) target = $region29
    $region28: #{tpu_custom_call.1} parent=1 // pred_region
      %53 = dma.done [#allocation7], 512
    $region29: #{tpu_custom_call.1} parent=1 // pred_fallthru
      _
    %v54 = vld [vmem:[#allocation3] sm:$0xff]
    %v55 = vld [vmem:[#allocation3 + $0x8] sm:$0xff]
    %v56 = vld [vmem:[#allocation3 + $0x10] sm:$0xff]
    %v57 = vld [vmem:[#allocation3 + $0x18] sm:$0xff]
    %v58 = vld [vmem:[#allocation3 + $0x20] sm:$0xff]
    %v59 = vld [vmem:[#allocation3 + $0x28] sm:$0xff]
    %v60 = vld [vmem:[#allocation3 + $0x30] sm:$0xff]
    %v61 = vld [vmem:[#allocation3 + $0x38] sm:$0xff]
    %v62 = vld [vmem:[#allocation3 + $0x40] sm:$0xff]
    %v63 = vld [vmem:[#allocation3 + $0x48] sm:$0xff]
    %v64 = vld [vmem:[#allocation3 + $0x50] sm:$0xff]
    %v65 = vld [vmem:[#allocation3 + $0x58] sm:$0xff]
    %v66 = vld [vmem:[#allocation3 + $0x60] sm:$0xff]
    %v67 = vld [vmem:[#allocation3 + $0x68] sm:$0xff]
    %v68 = vld [vmem:[#allocation3 + $0x70] sm:$0xff]
    %v69 = vld [vmem:[#allocation3 + $0x78] sm:$0xff]
    %v70 = vld [vmem:[#allocation6] sm:$0xff]
    %v71 = vld [vmem:[#allocation6 + $0x8] sm:$0xff]
    %v72 = vld [vmem:[#allocation6 + $0x10] sm:$0xff]
    %v73 = vld [vmem:[#allocation6 + $0x18] sm:$0xff]
    %v74 = vld [vmem:[%s2] sm:$0x1]
    %v76 = vperm.slane %v74, 0
    %vm78 = vcmask 261120
    %v80 = vsel %vm78, %v54, 0
    %v83 = vsel %vm78, %v55, 0
    %v86 = vsel %vm78, %v56, 0
    %v89 = vsel %vm78, %v57, 0
    %v92 = vsel %vm78, %v58, 0
    %v95 = vsel %vm78, %v59, 0
    %v98 = vsel %vm78, %v60, 0
    %v101 = vsel %vm78, %v61, 0
    %v104 = vsel %vm78, %v62, 0
    %v107 = vsel %vm78, %v63, 0
    %v110 = vsel %vm78, %v64, 0
    %v113 = vsel %vm78, %v65, 0
    %v116 = vsel %vm78, %v66, 0
    %v119 = vsel %vm78, %v67, 0
    %v122 = vsel %vm78, %v68, 0
    %v125 = vsel %vm78, %v69, 0
    %127 = vmatpush.msra.mxu0 0.0
    %128 = vmatpush.msra.mxu0 0.0
    %129 = vmatpush.msra.mxu0 0.0
    %130 = vmatpush.msra.mxu0 0.0
    %131 = vmatpush.msra.mxu0 0.0
    %132 = vmatpush.msra.mxu0 0.0
    %133 = vmatpush.msra.mxu0 0.0
    %134 = vmatpush.msra.mxu0 0.0
    %135 = vmatpush.msra.mxu0 0.0
    %136 = vmatpush.msra.mxu0 0.0
    %137 = vmatpush.msra.mxu0 0.0
    %138 = vmatpush.msra.mxu0 0.0
    %139 = vmatpush.msra.mxu0 %v73
    %140 = vmatpush.msra.mxu0 %v72
    %141 = vmatpush.msra.mxu0 %v71
    %142 = vmatpush.msra.mxu0 %v70
    %143 = vmatmul.f32.gmra.mxu0 %v80
    %v144 = vpop.f32.mrf.mxu0
    %v145 = vadd.f32 %v76, %v144
    %146 = vmatmul.f32.gmra.mxu0 %v83
    %v147 = vpop.f32.mrf.mxu0
    %v148 = vadd.f32 %v76, %v147
    %149 = vmatmul.f32.gmra.mxu0 %v86
    %v150 = vpop.f32.mrf.mxu0
    %v151 = vadd.f32 %v76, %v150
    %152 = vmatmul.f32.gmra.mxu0 %v89
    %v153 = vpop.f32.mrf.mxu0
    %v154 = vadd.f32 %v76, %v153
    %155 = vmatmul.f32.gmra.mxu0 %v92
    %v156 = vpop.f32.mrf.mxu0
    %v157 = vadd.f32 %v76, %v156
    %158 = vmatmul.f32.gmra.mxu0 %v95
    %v159 = vpop.f32.mrf.mxu0
    %v160 = vadd.f32 %v76, %v159
    %161 = vmatmul.f32.gmra.mxu0 %v98
    %v162 = vpop.f32.mrf.mxu0
    %v163 = vadd.f32 %v76, %v162
    %164 = vmatmul.f32.gmra.mxu0 %v101
    %v165 = vpop.f32.mrf.mxu0
    %v166 = vadd.f32 %v76, %v165
    %167 = vmatmul.f32.gmra.mxu0 %v104
    %v168 = vpop.f32.mrf.mxu0
    %v169 = vadd.f32 %v76, %v168
    %170 = vmatmul.f32.gmra.mxu0 %v107
    %v171 = vpop.f32.mrf.mxu0
    %v172 = vadd.f32 %v76, %v171
    %173 = vmatmul.f32.gmra.mxu0 %v110
    %v174 = vpop.f32.mrf.mxu0
    %v175 = vadd.f32 %v76, %v174
    %176 = vmatmul.f32.gmra.mxu0 %v113
    %v177 = vpop.f32.mrf.mxu0
    %v178 = vadd.f32 %v76, %v177
    %179 = vmatmul.f32.gmra.mxu0 %v116
    %v180 = vpop.f32.mrf.mxu0
    %v181 = vadd.f32 %v76, %v180
    %182 = vmatmul.f32.gmra.mxu0 %v119
    %v183 = vpop.f32.mrf.mxu0
    %v184 = vadd.f32 %v76, %v183
    %185 = vmatmul.f32.gmra.mxu0 %v122
    %v186 = vpop.f32.mrf.mxu0
    %v187 = vadd.f32 %v76, %v186
    %188 = vmatmul.f32.gmra.mxu0 %v125
    %v189 = vpop.f32.mrf.mxu0
    %v190 = vadd.f32 %v76, %v189
    %191 = vdwg.mxu0
    %vm192 = vcmp.gt.f32.partialorder %v145, 0.0
    %vm193 = vcmp.gt.f32.partialorder %v148, 0.0
    %vm194 = vcmp.gt.f32.partialorder %v151, 0.0
    %vm195 = vcmp.gt.f32.partialorder %v154, 0.0
    %vm196 = vcmp.gt.f32.partialorder %v157, 0.0
    %vm197 = vcmp.gt.f32.partialorder %v160, 0.0
    %vm198 = vcmp.gt.f32.partialorder %v163, 0.0
    %vm199 = vcmp.gt.f32.partialorder %v166, 0.0
    %vm200 = vcmp.gt.f32.partialorder %v169, 0.0
    %vm201 = vcmp.gt.f32.partialorder %v172, 0.0
    %vm202 = vcmp.gt.f32.partialorder %v175, 0.0
    %vm203 = vcmp.gt.f32.partialorder %v178, 0.0
    %vm204 = vcmp.gt.f32.partialorder %v181, 0.0
    %vm205 = vcmp.gt.f32.partialorder %v184, 0.0
    %vm206 = vcmp.gt.f32.partialorder %v187, 0.0
    %vm207 = vcmp.gt.f32.partialorder %v190, 0.0
    %v208 = vmul.f32 %v145, 0.01
    %v209 = vmul.f32 %v148, 0.01
    %v210 = vmul.f32 %v151, 0.01
    %v211 = vmul.f32 %v154, 0.01
    %v212 = vmul.f32 %v157, 0.01
    %v213 = vmul.f32 %v160, 0.01
    %v214 = vmul.f32 %v163, 0.01
    %v215 = vmul.f32 %v166, 0.01
    %v216 = vmul.f32 %v169, 0.01
    %v217 = vmul.f32 %v172, 0.01
    %v218 = vmul.f32 %v175, 0.01
    %v219 = vmul.f32 %v178, 0.01
    %v220 = vmul.f32 %v181, 0.01
    %v221 = vmul.f32 %v184, 0.01
    %v222 = vmul.f32 %v187, 0.01
    %v223 = vmul.f32 %v190, 0.01
    %v224 = vsel %vm192, %v145, %v208
    %v225 = vsel %vm193, %v148, %v209
    %v226 = vsel %vm194, %v151, %v210
    %v227 = vsel %vm195, %v154, %v211
    %v228 = vsel %vm196, %v157, %v212
    %v229 = vsel %vm197, %v160, %v213
    %v230 = vsel %vm198, %v163, %v214
    %v231 = vsel %vm199, %v166, %v215
    %v232 = vsel %vm200, %v169, %v216
    %v233 = vsel %vm201, %v172, %v217
    %v234 = vsel %vm202, %v175, %v218
    %v235 = vsel %vm203, %v178, %v219
    %v236 = vsel %vm204, %v181, %v220
    %v237 = vsel %vm205, %v184, %v221
    %v238 = vsel %vm206, %v187, %v222
    %v239 = vsel %vm207, %v190, %v223
    %v240 = vld [vmem:[%s3] sm:$0x1]
    %v242 = vperm.slane %v240, 0
    %v244 = vmul.f32 %v224, %v242
    %v245 = vmul.f32 %v225, %v242
    %v246 = vmul.f32 %v226, %v242
    %v247 = vmul.f32 %v227, %v242
    %v248 = vmul.f32 %v228, %v242
    %v249 = vmul.f32 %v229, %v242
    %v250 = vmul.f32 %v230, %v242
    %v251 = vmul.f32 %v231, %v242
    %v252 = vmul.f32 %v232, %v242
    %v253 = vmul.f32 %v233, %v242
    %v254 = vmul.f32 %v234, %v242
    %v255 = vmul.f32 %v235, %v242
    %v256 = vmul.f32 %v236, %v242
    %v257 = vmul.f32 %v237, %v242
    %v258 = vmul.f32 %v238, %v242
    %v259 = vmul.f32 %v239, %v242
    %260 = vadd.xlane.f32.xlu0 %v244
    %v261 = vpop.xlane.xlu0 %260
    %262 = vadd.xlane.f32.xlu0 %v245
    %v263 = vpop.xlane.xlu0 %262
    %264 = vadd.xlane.f32.xlu0 %v246
    %v265 = vpop.xlane.xlu0 %264
    %266 = vadd.xlane.f32.xlu0 %v247
    %v267 = vpop.xlane.xlu0 %266
    %268 = vadd.xlane.f32.xlu0 %v248
    %v269 = vpop.xlane.xlu0 %268
    %270 = vadd.xlane.f32.xlu0 %v249
    %v271 = vpop.xlane.xlu0 %270
    %272 = vadd.xlane.f32.xlu0 %v250
    %v273 = vpop.xlane.xlu0 %272
    %274 = vadd.xlane.f32.xlu0 %v251
    %v275 = vpop.xlane.xlu0 %274
    %276 = vadd.xlane.f32.xlu0 %v252
    %v277 = vpop.xlane.xlu0 %276
    %278 = vadd.xlane.f32.xlu0 %v253
    %v279 = vpop.xlane.xlu0 %278
    %280 = vadd.xlane.f32.xlu0 %v254
    %v281 = vpop.xlane.xlu0 %280
    %282 = vadd.xlane.f32.xlu0 %v255
    %v283 = vpop.xlane.xlu0 %282
    %284 = vadd.xlane.f32.xlu0 %v256
    %v285 = vpop.xlane.xlu0 %284
    %286 = vadd.xlane.f32.xlu0 %v257
    %v287 = vpop.xlane.xlu0 %286
    %288 = vadd.xlane.f32.xlu0 %v258
    %v289 = vpop.xlane.xlu0 %288
    %290 = vadd.xlane.f32.xlu0 %v259
    %v291 = vpop.xlane.xlu0 %290
    %s292 = sld [smem:[#allocation2]]
    %v293 = vstv %s292
    %v294 = vadd.f32 %v261, %v293
    %v295 = vadd.f32 %v263, %v293
    %v296 = vadd.f32 %v265, %v293
    %v297 = vadd.f32 %v267, %v293
    %v298 = vadd.f32 %v269, %v293
    %v299 = vadd.f32 %v271, %v293
    %v300 = vadd.f32 %v273, %v293
    %v301 = vadd.f32 %v275, %v293
    %v302 = vadd.f32 %v277, %v293
    %v303 = vadd.f32 %v279, %v293
    %v304 = vadd.f32 %v281, %v293
    %v305 = vadd.f32 %v283, %v293
    %v306 = vadd.f32 %v285, %v293
    %v307 = vadd.f32 %v287, %v293
    %v308 = vadd.f32 %v289, %v293
    %v309 = vadd.f32 %v291, %v293
    %v326 = vlaneseq
    %v327 = vand.u32 %v326, 127
    %v328 = vperm.slane %v294, %v327
    %v329 = vadd.s32 %v327, 4294967288
    %v330 = vperm.slane %v295, %v329
    %vm331 = vcmask 130112
    %v332 = vsel %vm331, %v330, %v328
    %v333 = vadd.s32 %v327, 4294967280
    %v334 = vperm.slane %v296, %v333
    %vm335 = vcmask 195712
    %v336 = vsel %vm335, %v334, %v332
    %v337 = vadd.s32 %v327, 4294967272
    %v338 = vperm.slane %v297, %v337
    %vm339 = vcmask 261312
    %v340 = vsel %vm339, %v338, %v336
    %v341 = vadd.s32 %v327, 4294967264
    %v342 = vperm.slane %v298, %v341
    %vm343 = vcmask 326912
    %v344 = vsel %vm343, %v342, %v340
    %v345 = vadd.s32 %v327, 4294967256
    %v346 = vperm.slane %v299, %v345
    %vm347 = vcmask 392512
    %v348 = vsel %vm347, %v346, %v344
    %v349 = vadd.s32 %v327, 4294967248
    %v350 = vperm.slane %v300, %v349
    %vm351 = vcmask 458112
    %v352 = vsel %vm351, %v350, %v348
    %v353 = vadd.s32 %v327, 4294967240
    %v354 = vperm.slane %v301, %v353
    %vm355 = vcmask 523712
    %v356 = vsel %vm355, %v354, %v352
    %v357 = vadd.s32 %v327, 4294967232
    %v358 = vperm.slane %v302, %v357
    %vm359 = vcmask 589312
    %v360 = vsel %vm359, %v358, %v356
    %v361 = vadd.s32 %v327, 4294967224
    %v362 = vperm.slane %v303, %v361
    %vm363 = vcmask 654912
    %v364 = vsel %vm363, %v362, %v360
    %v365 = vadd.s32 %v327, 4294967216
    %v366 = vperm.slane %v304, %v365
    %vm367 = vcmask 720512
    %v368 = vsel %vm367, %v366, %v364
    %v369 = vadd.s32 %v327, 4294967208
    %v370 = vperm.slane %v305, %v369
    %vm371 = vcmask 786112
    %v372 = vsel %vm371, %v370, %v368
    %v373 = vadd.s32 %v327, 4294967200
    %v374 = vperm.slane %v306, %v373
    %vm375 = vcmask 851712
    %v376 = vsel %vm375, %v374, %v372
    %v377 = vadd.s32 %v327, 4294967192
    %v378 = vperm.slane %v307, %v377
    %vm379 = vcmask 917312
    %v380 = vsel %vm379, %v378, %v376
    %v381 = vadd.s32 %v327, 4294967184
    %v382 = vperm.slane %v308, %v381
    %vm383 = vcmask 982912
    %v384 = vsel %vm383, %v382, %v380
    %v385 = vadd.s32 %v327, 4294967176
    %v386 = vperm.slane %v309, %v385
    %vm387 = vcmask 1048512
    %v388 = vsel %vm387, %v386, %v384
    %390 = vst [vmem:[#allocation8] sm:$0x1] %v388
    // Predicated region
    $region30: #{tpu_custom_call.1} parent=1 // pred_check
      _
    $region31: #{tpu_custom_call.1} parent=1 // pred_check_branch
      %392 = sbr.rel (0) target = $region33
    $region32: #{tpu_custom_call.1} parent=1 // pred_region
      %394 = vsyncadd [#allocation5], 0
      %s396 = sshll.u32 [#allocation8], 4
      %s397 = int_to_ptr.vmem [resolvable:$true] %s396
      %s398 = sshll.u32 %s5, 4
      %s399 = int_to_ptr.hbm [resolvable:$true] %s398
      %401 = dma.vmem_to_hbm [thread:$0]  %s397, 16, %s399, [#allocation5]
    $region33: #{tpu_custom_call.1} parent=1 // pred_fallthru
      _
    // Predicated region
    $region34: #{tpu_custom_call.1} parent=1 // pred_check
      _
    $region35: #{tpu_custom_call.1} parent=1 // pred_check_branch
      %403 = sbr.rel (0) target = $region37
    $region36: #{tpu_custom_call.1} parent=1 // pred_region
      %405 = dma.done [#allocation5], 16
    $region37: #{tpu_custom_call.1} parent=1 // pred_fallthru
      _
    %406 = vsyncpa [#allocation4], 1
    %407 = vsyncpa [#allocation7], 1
    %408 = vsyncpa [#allocation5], 1

</llo_original>
